<compile_context>
chip_gen: v5e
topology: v5e:2x2
jax: 0.10.0
libtpu: 0.0.40
codegen_flags: <defaults>
</compile_context>

<pallas_src>
import jax
import jax.numpy as jnp
from jax.experimental import pallas as pl
from jax.experimental.pallas import tpu as pltpu

B, C, L = 2, 16, 64      # batch, channels (in_layer == out_layer), length
BL = B * L               # packed lane width (= 128 -> one full vreg row per sublane group)
K = 3                    # kernel_size
DIL = 2                  # dilation
PAD = 2                  # padding (fixed to 2 in conbr_block)
EPS = 1e-5               # BatchNorm1d default eps
C8 = C // 8              # se_block bottleneck channels
KC = K * C               # flattened conv weight width
SC = 2 * KC + 2 * C      # lane offset of the per-channel scalar columns in the param slab
assert L & (L - 1) == 0, "L must be a power of two for the bitwise segment math"
LOG2L = L.bit_length() - 1


def re_block_kernel(x_ref, p_ref, o_ref):
    # ---- in-kernel layout plumbing: [B, C, L] -> lane-dense [C, B*L] slab ----
    xp = jnp.concatenate([x_ref[b] for b in range(B)], axis=1)      # [C, BL] f32

    # ---- lane bookkeeping (one iota, reused for conv padding masks + gate select) ----
    lane = jax.lax.broadcasted_iota(jnp.int32, (C, BL), 1)
    lpos = lane & (L - 1)                                           # position inside segment
    lmask = lpos < PAD                                              # invalid lanes for l-2 tap
    rmask = lpos >= (L - PAD)                                       # invalid lanes for l+2 tap
    seg = lane >> LOG2L                                             # batch-segment id per lane

    # segment-mean selector for the SE block (contraction dim = BL -> fine on the MXU)
    rT = jax.lax.broadcasted_iota(jnp.int32, (BL, B), 0)
    cT = jax.lax.broadcasted_iota(jnp.int32, (BL, B), 1)
    selT = ((rT >> LOG2L) == cT).astype(jnp.float32) * (1.0 / L)    # [BL, B], 1/L folded in

    inv_n = jnp.full((BL, 1), 1.0 / BL, dtype=jnp.float32)          # BN sums on the MXU

    # ---- static views of the single packed parameter slab [C, 134] ----
    w1 = p_ref[:, 0:KC]                    # [C, K*C] conv1 weight (im2col layout)
    w2 = p_ref[:, KC:2 * KC]               # [C, K*C] conv2 weight
    sw1p = p_ref[:, 2 * KC:2 * KC + C]     # [C, C]  se conv1, rows >= C8 are zero
    sw2p = p_ref[:, 2 * KC + C:SC]         # [C, C]  se conv2, cols >= C8 are zero
    g1 = p_ref[:, SC + 0:SC + 1];  be1 = p_ref[:, SC + 1:SC + 2]
    g2 = p_ref[:, SC + 2:SC + 3];  be2 = p_ref[:, SC + 3:SC + 4]
    sb1 = p_ref[:, SC + 4:SC + 5]          # rows >= C8 zero (killed by sw2p zero cols)
    sb2 = p_ref[:, SC + 5:SC + 6]

    def dilated_conv(h, w_flat):
        # taps h[:, l-2], h[:, l], h[:, l+2] with zeros outside each batch segment
        # (K=3, dil=2, pad=2 hard-wired). Conv bias omitted: it feeds straight into
        # training-mode BN and cancels exactly.
        t0 = jnp.where(lmask, 0.0, pltpu.roll(h, PAD, axis=1))
        t2 = jnp.where(rmask, 0.0, pltpu.roll(h, BL - PAD, axis=1))
        cols = jnp.concatenate([t0, h, t2], axis=0)                 # [K*C, BL]
        return jnp.dot(w_flat, cols, preferred_element_type=jnp.float32)

    def bn_relu(h, g, be):
        # training-mode BatchNorm1d: biased stats over (B, L) == all BL lanes.
        # Sums are computed on the (otherwise idle) MXU instead of XLU lane reductions.
        mean = jnp.dot(h, inv_n, preferred_element_type=jnp.float32)      # [C, 1]
        ex2 = jnp.dot(h * h, inv_n, preferred_element_type=jnp.float32)   # [C, 1]
        var = ex2 - mean * mean
        scale = g * jax.lax.rsqrt(var + EPS)
        shift = be - mean * scale
        return jnp.maximum(h * scale + shift, 0.0)

    h = bn_relu(dilated_conv(xp, w1), g1, be1)                       # cbr1
    h = bn_relu(dilated_conv(h, w2), g2, be2)                        # cbr2

    # ---- se_block: per-batch mean -> 1x1 conv -> ReLU -> 1x1 conv -> sigmoid -> bcast ----
    s = jnp.dot(h, selT, preferred_element_type=jnp.float32)                        # [C, B]
    z = jnp.maximum(jnp.dot(sw1p, s, preferred_element_type=jnp.float32) + sb1, 0.0)  # [C, B]
    gate = jax.nn.sigmoid(jnp.dot(sw2p, z, preferred_element_type=jnp.float32) + sb2)  # [C, B]

    # gate broadcast over lanes: pure-VPU select (replaces the contraction-2 matmul)
    gate_b = gate[:, 0:1]
    for b in range(1, B):
        gate_b = jnp.where(seg == b, gate[:, b:b + 1], gate_b)       # [C, BL]

    # residual adds: x + (cbr2_out + gate), then unpack lanes back to [B, C, L]
    res = xp + h + gate_b
    for b in range(B):
        o_ref[b] = res[:, b * L:(b + 1) * L].astype(o_ref.dtype)


def pack_params(params):
    """Host-side one-time packing of all weights into one [C, 134] slab (one DMA)."""
    w1, b1, g1, be1, w2, b2, g2, be2, sw1, sb1, sw2, sb2 = params
    del b1, b2  # conv bias cancels exactly against training-mode BatchNorm
    # conv weights [K, Cout, Cin] -> [Cout, K*Cin] (tap order must match the kernel's cols)
    w1f = jnp.concatenate([w1[k] for k in range(K)], axis=1)         # [C, K*C]
    w2f = jnp.concatenate([w2[k] for k in range(K)], axis=1)         # [C, K*C]
    # SE weights zero-padded to [C, C] so both 1x1 convs are plain [C,C]x[C,B] matmuls
    sw1p = jnp.zeros((C, C), jnp.float32).at[:C8, :].set(sw1)        # rows 0:C8 = sw1
    sw2p = jnp.zeros((C, C), jnp.float32).at[:, :C8].set(sw2)        # cols 0:C8 = sw2
    sb1p = jnp.zeros((C, 1), jnp.float32).at[:C8, 0].set(sb1[:, 0])
    scal = jnp.concatenate([g1[0], be1[0], g2[0], be2[0], sb1p, sb2], axis=1)  # [C, 6]
    return jnp.concatenate([w1f, w2f, sw1p, sw2p, scal], axis=1)     # [C, 2*K*C + 2*C + 6]


def re_block_pallas(x, params):
    p = pack_params(params)
    vmem = pl.BlockSpec(memory_space=pltpu.MemorySpace.VMEM)
    return pl.pallas_call(
        re_block_kernel,
        out_shape=jax.ShapeDtypeStruct((B, C, L), jnp.float32),
        in_specs=[vmem, vmem],
        out_specs=vmem,
    )(x, p)


def re_block_ref(x, params):
    """Pure-JAX reference mirroring the PyTorch forward (training-mode BN, with conv bias)."""
    w1, b1, g1, be1, w2, b2, g2, be2, sw1, sb1, sw2, sb2 = params

    def conbr(xin, w, bias, g, beta):
        xp = jnp.pad(xin, ((0, 0), (0, 0), (PAD, PAD)))
        out = bias[None, :, :]
        out = out + sum(
            jnp.einsum('oi,bil->bol', w[k], xp[:, :, k * DIL:k * DIL + L])
            for k in range(K))
        mean = out.mean(axis=(0, 2), keepdims=True)
        var = ((out - mean) ** 2).mean(axis=(0, 2), keepdims=True)
        out = g * (out - mean) * jax.lax.rsqrt(var + EPS) + beta
        return jnp.maximum(out, 0.0)

    h = conbr(x, w1, b1, g1, be1)
    h = conbr(h, w2, b2, g2, be2)
    s = h.mean(axis=2, keepdims=True)                                # [B, C, 1]
    z = jnp.maximum(jnp.einsum('oc,bcl->bol', sw1, s) + sb1[None, :, :], 0.0)
    gate = jax.nn.sigmoid(jnp.einsum('oc,bcl->bol', sw2, z) + sb2[None, :, :])
    return x + h + gate


if __name__ == "__main__":
    key = jax.random.PRNGKey(0)
    ks = jax.random.split(key, 16)
    scale = 0.2

    x = jax.random.normal(ks[0], (B, C, L), jnp.float32)

    # Deterministic synthetic parameters (shapes follow the module's __init__).
    # NOTE: se_block.fc / se_block.fc2 (nn.Linear) are unused in forward -> omitted.
    w1 = scale * jax.random.normal(ks[1], (K, C, C), jnp.float32)    # conv1 weight [k, cout, cin]
    b1 = scale * jax.random.normal(ks[2], (C, 1), jnp.float32)
    g1 = 1.0 + 0.1 * jax.random.normal(ks[3], (1, C, 1), jnp.float32)   # BN1 gamma
    be1 = 0.1 * jax.random.normal(ks[4], (1, C, 1), jnp.float32)        # BN1 beta
    w2 = scale * jax.random.normal(ks[5], (K, C, C), jnp.float32)
    b2 = scale * jax.random.normal(ks[6], (C, 1), jnp.float32)
    g2 = 1.0 + 0.1 * jax.random.normal(ks[7], (1, C, 1), jnp.float32)
    be2 = 0.1 * jax.random.normal(ks[8], (1, C, 1), jnp.float32)
    sw1 = scale * jax.random.normal(ks[9], (C8, C), jnp.float32)        # se conv1 (1x1)
    sb1 = scale * jax.random.normal(ks[10], (C8, 1), jnp.float32)
    sw2 = scale * jax.random.normal(ks[11], (C, C8), jnp.float32)       # se conv2 (1x1)
    sb2 = scale * jax.random.normal(ks[12], (C, 1), jnp.float32)

    params = (w1, b1, g1, be1, w2, b2, g2, be2, sw1, sb1, sw2, sb2)

    out = re_block_pallas(x, params)
    out = jax.block_until_ready(out)

    ref = re_block_ref(x, params)
    assert out.shape == (B, C, L) and out.dtype == jnp.float32
    assert jnp.allclose(out, ref, atol=1e-4, rtol=1e-4), \
        f"max abs err {jnp.max(jnp.abs(out - ref))}"

    print("KERNEL_OK")
</pallas_src>

<mosaic_0001>
module attributes {stable_mosaic.version = 11 : i64} {
  func.func @re_block_kernel(%arg0: memref<2x16x64xf32, #tpu.memory_space<vmem>>, %arg1: memref<16x134xf32, #tpu.memory_space<vmem>>, %arg2: memref<2x16x64xf32, #tpu.memory_space<vmem>>) attributes {dimension_semantics = [], scalar_prefetch = 0 : i64, scratch_operands = 0 : i64, tpu.core_type = #tpu.core_type<tc>} {
    %c0 = arith.constant 0 : index
    %c0_0 = arith.constant 0 : index
    %c0_1 = arith.constant 0 : index
    %0 = vector.load %arg0[%c0, %c0_0, %c0_1] : memref<2x16x64xf32, #tpu.memory_space<vmem>>, vector<1x16x64xf32>
    %1 = vector.shape_cast %0 : vector<1x16x64xf32> to vector<16x64xf32>
    %c1 = arith.constant 1 : index
    %c0_2 = arith.constant 0 : index
    %c0_3 = arith.constant 0 : index
    %2 = vector.load %arg0[%c1, %c0_2, %c0_3] : memref<2x16x64xf32, #tpu.memory_space<vmem>>, vector<1x16x64xf32>
    %3 = vector.shape_cast %2 : vector<1x16x64xf32> to vector<16x64xf32>
    %4 = tpu.concatenate %1, %3 in 1 : vector<16x64xf32>, vector<16x64xf32> -> vector<16x128xf32>
    %5 = tpu.iota {dimensions = array<i32: 1>} : vector<16x128xi32>
    %c63_i32 = arith.constant 63 : i32
    %6 = vector.broadcast %c63_i32 : i32 to vector<16x128xi32>
    %7 = arith.andi %5, %6 : vector<16x128xi32>
    %c2_i32 = arith.constant 2 : i32
    %8 = vector.broadcast %c2_i32 : i32 to vector<16x128xi32>
    %9 = arith.cmpi slt, %7, %8 : vector<16x128xi32>
    %c62_i32 = arith.constant 62 : i32
    %10 = vector.broadcast %c62_i32 : i32 to vector<16x128xi32>
    %11 = arith.cmpi sge, %7, %10 : vector<16x128xi32>
    %c6_i32 = arith.constant 6 : i32
    %12 = vector.broadcast %c6_i32 : i32 to vector<16x128xi32>
    %13 = arith.shrsi %5, %12 : vector<16x128xi32>
    %14 = tpu.iota {dimensions = array<i32: 0>} : vector<128x2xi32>
    %15 = tpu.iota {dimensions = array<i32: 1>} : vector<128x2xi32>
    %c6_i32_4 = arith.constant 6 : i32
    %16 = vector.broadcast %c6_i32_4 : i32 to vector<128x2xi32>
    %17 = arith.shrsi %14, %16 : vector<128x2xi32>
    %18 = arith.cmpi eq, %17, %15 : vector<128x2xi32>
    %19 = arith.extui %18 : vector<128x2xi1> to vector<128x2xi32>
    %20 = arith.sitofp %19 : vector<128x2xi32> to vector<128x2xf32>
    %cst = arith.constant 1.562500e-02 : f32
    %21 = vector.broadcast %cst : f32 to vector<128x2xf32>
    %22 = arith.mulf %20, %21 : vector<128x2xf32>
    %cst_5 = arith.constant 7.812500e-03 : f32
    %23 = vector.broadcast %cst_5 : f32 to vector<128x1xf32>
    %c0_6 = arith.constant 0 : index
    %c0_7 = arith.constant 0 : index
    %24 = vector.load %arg1[%c0_6, %c0_7] : memref<16x134xf32, #tpu.memory_space<vmem>>, vector<16x48xf32>
    %c0_8 = arith.constant 0 : index
    %c48 = arith.constant 48 : index
    %25 = vector.load %arg1[%c0_8, %c48] : memref<16x134xf32, #tpu.memory_space<vmem>>, vector<16x48xf32>
    %c0_9 = arith.constant 0 : index
    %c96 = arith.constant 96 : index
    %26 = vector.load %arg1[%c0_9, %c96] : memref<16x134xf32, #tpu.memory_space<vmem>>, vector<16x16xf32>
    %c0_10 = arith.constant 0 : index
    %c112 = arith.constant 112 : index
    %27 = vector.load %arg1[%c0_10, %c112] : memref<16x134xf32, #tpu.memory_space<vmem>>, vector<16x16xf32>
    %c0_11 = arith.constant 0 : index
    %c128 = arith.constant 128 : index
    %28 = vector.load %arg1[%c0_11, %c128] : memref<16x134xf32, #tpu.memory_space<vmem>>, vector<16x1xf32>
    %c0_12 = arith.constant 0 : index
    %c129 = arith.constant 129 : index
    %29 = vector.load %arg1[%c0_12, %c129] : memref<16x134xf32, #tpu.memory_space<vmem>>, vector<16x1xf32>
    %c0_13 = arith.constant 0 : index
    %c130 = arith.constant 130 : index
    %30 = vector.load %arg1[%c0_13, %c130] : memref<16x134xf32, #tpu.memory_space<vmem>>, vector<16x1xf32>
    %c0_14 = arith.constant 0 : index
    %c131 = arith.constant 131 : index
    %31 = vector.load %arg1[%c0_14, %c131] : memref<16x134xf32, #tpu.memory_space<vmem>>, vector<16x1xf32>
    %c0_15 = arith.constant 0 : index
    %c132 = arith.constant 132 : index
    %32 = vector.load %arg1[%c0_15, %c132] : memref<16x134xf32, #tpu.memory_space<vmem>>, vector<16x1xf32>
    %c0_16 = arith.constant 0 : index
    %c133 = arith.constant 133 : index
    %33 = vector.load %arg1[%c0_16, %c133] : memref<16x134xf32, #tpu.memory_space<vmem>>, vector<16x1xf32>
    %c2_i32_17 = arith.constant 2 : i32
    %34 = tpu.dynamic_rotate %4 by %c2_i32_17 dim 1 : vector<16x128xf32>, i32 -> vector<16x128xf32>
    %cst_18 = arith.constant 0.000000e+00 : f32
    %35 = vector.broadcast %cst_18 : f32 to vector<16x128xf32>
    %36 = arith.select %9, %35, %34 : vector<16x128xi1>, vector<16x128xf32>
    %c126_i32 = arith.constant 126 : i32
    %37 = tpu.dynamic_rotate %4 by %c126_i32 dim 1 : vector<16x128xf32>, i32 -> vector<16x128xf32>
    %cst_19 = arith.constant 0.000000e+00 : f32
    %38 = vector.broadcast %cst_19 : f32 to vector<16x128xf32>
    %39 = arith.select %11, %38, %37 : vector<16x128xi1>, vector<16x128xf32>
    %40 = tpu.concatenate %36, %4, %39 in 0 : vector<16x128xf32>, vector<16x128xf32>, vector<16x128xf32> -> vector<48x128xf32>
    %cst_20 = arith.constant dense<0.000000e+00> : vector<16x128xf32>
    %41 = tpu.matmul %24, %40, %cst_20 {dimension_numbers = #tpu.dot_dimension_numbers<[1], [0], [0], [1], [0, 0, 1, 1], [], []>} : vector<16x48xf32>, vector<48x128xf32>, vector<16x128xf32> -> vector<16x128xf32>
    %cst_21 = arith.constant dense<0.000000e+00> : vector<16x1xf32>
    %42 = tpu.matmul %41, %23, %cst_21 {dimension_numbers = #tpu.dot_dimension_numbers<[1], [0], [0], [1], [0, 0, 1, 1], [], []>} : vector<16x128xf32>, vector<128x1xf32>, vector<16x1xf32> -> vector<16x1xf32>
    %43 = arith.mulf %41, %41 : vector<16x128xf32>
    %cst_22 = arith.constant dense<0.000000e+00> : vector<16x1xf32>
    %44 = tpu.matmul %43, %23, %cst_22 {dimension_numbers = #tpu.dot_dimension_numbers<[1], [0], [0], [1], [0, 0, 1, 1], [], []>} : vector<16x128xf32>, vector<128x1xf32>, vector<16x1xf32> -> vector<16x1xf32>
    %45 = arith.mulf %42, %42 : vector<16x1xf32>
    %46 = arith.subf %44, %45 : vector<16x1xf32>
    %cst_23 = arith.constant 9.99999974E-6 : f32
    %47 = vector.broadcast %cst_23 : f32 to vector<16x1xf32>
    %48 = arith.addf %46, %47 : vector<16x1xf32>
    %49 = math.rsqrt %48 : vector<16x1xf32>
    %50 = arith.mulf %28, %49 : vector<16x1xf32>
    %51 = arith.mulf %42, %50 : vector<16x1xf32>
    %52 = arith.subf %29, %51 : vector<16x1xf32>
    %53 = vector.broadcast %50 : vector<16x1xf32> to vector<16x128xf32>
    %54 = arith.mulf %41, %53 : vector<16x128xf32>
    %55 = vector.broadcast %52 : vector<16x1xf32> to vector<16x128xf32>
    %56 = arith.addf %54, %55 : vector<16x128xf32>
    %cst_24 = arith.constant 0.000000e+00 : f32
    %57 = vector.broadcast %cst_24 : f32 to vector<16x128xf32>
    %58 = arith.maximumf %56, %57 : vector<16x128xf32>
    %c2_i32_25 = arith.constant 2 : i32
    %59 = tpu.dynamic_rotate %58 by %c2_i32_25 dim 1 : vector<16x128xf32>, i32 -> vector<16x128xf32>
    %cst_26 = arith.constant 0.000000e+00 : f32
    %60 = vector.broadcast %cst_26 : f32 to vector<16x128xf32>
    %61 = arith.select %9, %60, %59 : vector<16x128xi1>, vector<16x128xf32>
    %c126_i32_27 = arith.constant 126 : i32
    %62 = tpu.dynamic_rotate %58 by %c126_i32_27 dim 1 : vector<16x128xf32>, i32 -> vector<16x128xf32>
    %cst_28 = arith.constant 0.000000e+00 : f32
    %63 = vector.broadcast %cst_28 : f32 to vector<16x128xf32>
    %64 = arith.select %11, %63, %62 : vector<16x128xi1>, vector<16x128xf32>
    %65 = tpu.concatenate %61, %58, %64 in 0 : vector<16x128xf32>, vector<16x128xf32>, vector<16x128xf32> -> vector<48x128xf32>
    %cst_29 = arith.constant dense<0.000000e+00> : vector<16x128xf32>
    %66 = tpu.matmul %25, %65, %cst_29 {dimension_numbers = #tpu.dot_dimension_numbers<[1], [0], [0], [1], [0, 0, 1, 1], [], []>} : vector<16x48xf32>, vector<48x128xf32>, vector<16x128xf32> -> vector<16x128xf32>
    %cst_30 = arith.constant dense<0.000000e+00> : vector<16x1xf32>
    %67 = tpu.matmul %66, %23, %cst_30 {dimension_numbers = #tpu.dot_dimension_numbers<[1], [0], [0], [1], [0, 0, 1, 1], [], []>} : vector<16x128xf32>, vector<128x1xf32>, vector<16x1xf32> -> vector<16x1xf32>
    %68 = arith.mulf %66, %66 : vector<16x128xf32>
    %cst_31 = arith.constant dense<0.000000e+00> : vector<16x1xf32>
    %69 = tpu.matmul %68, %23, %cst_31 {dimension_numbers = #tpu.dot_dimension_numbers<[1], [0], [0], [1], [0, 0, 1, 1], [], []>} : vector<16x128xf32>, vector<128x1xf32>, vector<16x1xf32> -> vector<16x1xf32>
    %70 = arith.mulf %67, %67 : vector<16x1xf32>
    %71 = arith.subf %69, %70 : vector<16x1xf32>
    %cst_32 = arith.constant 9.99999974E-6 : f32
    %72 = vector.broadcast %cst_32 : f32 to vector<16x1xf32>
    %73 = arith.addf %71, %72 : vector<16x1xf32>
    %74 = math.rsqrt %73 : vector<16x1xf32>
    %75 = arith.mulf %30, %74 : vector<16x1xf32>
    %76 = arith.mulf %67, %75 : vector<16x1xf32>
    %77 = arith.subf %31, %76 : vector<16x1xf32>
    %78 = vector.broadcast %75 : vector<16x1xf32> to vector<16x128xf32>
    %79 = arith.mulf %66, %78 : vector<16x128xf32>
    %80 = vector.broadcast %77 : vector<16x1xf32> to vector<16x128xf32>
    %81 = arith.addf %79, %80 : vector<16x128xf32>
    %cst_33 = arith.constant 0.000000e+00 : f32
    %82 = vector.broadcast %cst_33 : f32 to vector<16x128xf32>
    %83 = arith.maximumf %81, %82 : vector<16x128xf32>
    %cst_34 = arith.constant dense<0.000000e+00> : vector<16x2xf32>
    %84 = tpu.matmul %83, %22, %cst_34 {dimension_numbers = #tpu.dot_dimension_numbers<[1], [0], [0], [1], [0, 0, 1, 1], [], []>} : vector<16x128xf32>, vector<128x2xf32>, vector<16x2xf32> -> vector<16x2xf32>
    %cst_35 = arith.constant dense<0.000000e+00> : vector<16x2xf32>
    %85 = tpu.matmul %26, %84, %cst_35 {dimension_numbers = #tpu.dot_dimension_numbers<[1], [0], [0], [1], [0, 0, 1, 1], [], []>} : vector<16x16xf32>, vector<16x2xf32>, vector<16x2xf32> -> vector<16x2xf32>
    %86 = vector.broadcast %32 : vector<16x1xf32> to vector<16x2xf32>
    %87 = arith.addf %85, %86 : vector<16x2xf32>
    %cst_36 = arith.constant 0.000000e+00 : f32
    %88 = vector.broadcast %cst_36 : f32 to vector<16x2xf32>
    %89 = arith.maximumf %87, %88 : vector<16x2xf32>
    %cst_37 = arith.constant dense<0.000000e+00> : vector<16x2xf32>
    %90 = tpu.matmul %27, %89, %cst_37 {dimension_numbers = #tpu.dot_dimension_numbers<[1], [0], [0], [1], [0, 0, 1, 1], [], []>} : vector<16x16xf32>, vector<16x2xf32>, vector<16x2xf32> -> vector<16x2xf32>
    %91 = vector.broadcast %33 : vector<16x1xf32> to vector<16x2xf32>
    %92 = arith.addf %90, %91 : vector<16x2xf32>
    %93 = arith.negf %92 : vector<16x2xf32>
    %94 = math.exp %93 : vector<16x2xf32>
    %cst_38 = arith.constant 1.000000e+00 : f32
    %95 = vector.broadcast %cst_38 : f32 to vector<16x2xf32>
    %96 = arith.addf %95, %94 : vector<16x2xf32>
    %97 = arith.divf %95, %96 : vector<16x2xf32>
    %98 = vector.extract_strided_slice %97 {offsets = [0, 0], sizes = [16, 1], strides = [1, 1]} : vector<16x2xf32> to vector<16x1xf32>
    %c1_i32 = arith.constant 1 : i32
    %99 = vector.broadcast %c1_i32 : i32 to vector<16x128xi32>
    %100 = arith.cmpi eq, %13, %99 : vector<16x128xi32>
    %101 = vector.extract_strided_slice %97 {offsets = [0, 1], sizes = [16, 1], strides = [1, 1]} : vector<16x2xf32> to vector<16x1xf32>
    %102 = vector.shape_cast %101 : vector<16x1xf32> to vector<16x1xf32>
    %103 = vector.broadcast %102 : vector<16x1xf32> to vector<16x128xf32>
    %104 = vector.shape_cast %98 : vector<16x1xf32> to vector<16x1xf32>
    %105 = vector.broadcast %104 : vector<16x1xf32> to vector<16x128xf32>
    %106 = arith.select %100, %103, %105 : vector<16x128xi1>, vector<16x128xf32>
    %107 = arith.addf %4, %83 : vector<16x128xf32>
    %108 = arith.addf %107, %106 : vector<16x128xf32>
    %109 = vector.extract_strided_slice %108 {offsets = [0, 0], sizes = [16, 64], strides = [1, 1]} : vector<16x128xf32> to vector<16x64xf32>
    %c0_39 = arith.constant 0 : index
    %c0_40 = arith.constant 0 : index
    %c0_41 = arith.constant 0 : index
    %110 = vector.load %arg2[%c0_39, %c0_40, %c0_41] : memref<2x16x64xf32, #tpu.memory_space<vmem>>, vector<1x16x64xf32>
    %111 = vector.shape_cast %110 : vector<1x16x64xf32> to vector<16x64xf32>
    %112 = vector.shape_cast %109 : vector<16x64xf32> to vector<1x16x64xf32>
    tpu.vector_store %arg2[%c0_39, %c0_40, %c0_41], %112 {strides = array<i32>} : memref<2x16x64xf32, #tpu.memory_space<vmem>>, vector<1x16x64xf32>,
    %113 = vector.extract_strided_slice %108 {offsets = [0, 64], sizes = [16, 64], strides = [1, 1]} : vector<16x128xf32> to vector<16x64xf32>
    %c1_42 = arith.constant 1 : index
    %c0_43 = arith.constant 0 : index
    %c0_44 = arith.constant 0 : index
    %114 = vector.load %arg2[%c1_42, %c0_43, %c0_44] : memref<2x16x64xf32, #tpu.memory_space<vmem>>, vector<1x16x64xf32>
    %115 = vector.shape_cast %114 : vector<1x16x64xf32> to vector<16x64xf32>
    %116 = vector.shape_cast %113 : vector<16x64xf32> to vector<1x16x64xf32>
    tpu.vector_store %arg2[%c1_42, %c0_43, %c0_44], %116 {strides = array<i32>} : memref<2x16x64xf32, #tpu.memory_space<vmem>>, vector<1x16x64xf32>,
    return
  }
}

</mosaic_0001>

<llo_original>
// kernel: tpu_custom_call.1
$region0: #{tpu_custom_call.1}
  #allocation0 [shape = 'u32[]', space=smem, size = 0x4, offset = 0x4, fixed_abs, tag = 'smem constant byte address 0x4 - core index']
  #allocation1 [shape = 'u32[72,128]{1,0:T(1,128)}', space=vmem, size = 0x9000, scoped, tag = 'internal scratch']
  %s0 = inlined_call_operand.hbm [shape: f32[2,16,64], index: 0, kind: input, shape index: {}]
  %s1 = inlined_call_operand.hbm [shape: f32[16,134], index: 1, kind: input, shape index: {}]
  %s2 = inlined_call_operand.hbm [shape: f32[2,16,64], index: 2, kind: output, shape index: {}]
  %s3 = sld [smem:[#allocation0]]
  $region26: #{tpu_custom_call.1} parent=0
    _
  %s5 = ssub.s32 1, %s3
  %s6 = scalar_select 0, %s5, %s3
  $region1: #{tpu_custom_call.1} parent=0
    #allocation2 [shape = 'u8[16384]{0}', space=vmem, size = 0x4000, scoped, tag = 'input window, operand 0, single buffered']
    #allocation3 [shape = 's32[1]{0}', space=sflag, size = 0x4, scoped, tag = 'scoped memory for tpu_custom_call.1']
    #allocation4 [shape = 's32[1]{0}', space=sflag, size = 0x4, scoped, tag = 'scoped memory for tpu_custom_call.1']
    #allocation5 [shape = 'u8[16384]{0}', space=vmem, size = 0x4000, scoped, tag = 'input window, operand 1, single buffered']
    #allocation6 [shape = 's32[1]{0}', space=sflag, size = 0x4, scoped, tag = 'scoped memory for tpu_custom_call.1']
    #allocation7 [shape = 'u8[16384]{0}', space=vmem, size = 0x4000, scoped, tag = 'output window, operand 0, single buffered']
    %7 = vsyncpa [#allocation3], 0
    %8 = vsyncpa [#allocation6], 0
    %9 = vsyncpa [#allocation4], 0
    // Predicated region
    $region2: #{tpu_custom_call.1} parent=1 // pred_check
      _
    $region3: #{tpu_custom_call.1} parent=1 // pred_check_branch
      %11 = sbr.rel (0) target = $region5
    $region4: #{tpu_custom_call.1} parent=1 // pred_region
      %13 = vsyncadd [#allocation3], 0
      %s14 = sshll.u32 %s0, 4
      %s15 = int_to_ptr.hbm [resolvable:$true] %s14
      %s16 = sshll.u32 [#allocation2], 4
      %s17 = int_to_ptr.vmem [resolvable:$true] %s16
      %22 = dma.hbm_to_vmem [thread:$0]  %s15, 512, %s17, [#allocation3], 128, 128, 8
    $region5: #{tpu_custom_call.1} parent=1 // pred_fallthru
      _
    // Predicated region
    $region6: #{tpu_custom_call.1} parent=1 // pred_check
      _
    $region7: #{tpu_custom_call.1} parent=1 // pred_check_branch
      %24 = sbr.rel (0) target = $region9
    $region8: #{tpu_custom_call.1} parent=1 // pred_region
      %26 = vsyncadd [#allocation6], 0
      %s27 = sshll.u32 %s1, 4
      %s28 = int_to_ptr.hbm [resolvable:$true] %s27
      %s29 = sshll.u32 [#allocation5], 4
      %s30 = int_to_ptr.vmem [resolvable:$true] %s29
      %35 = dma.hbm_to_vmem [thread:$0]  %s28, 512, %s30, [#allocation6], 256, 256, 16
    $region9: #{tpu_custom_call.1} parent=1 // pred_fallthru
      _
    // Predicated region
    $region10: #{tpu_custom_call.1} parent=1 // pred_check
      _
    $region11: #{tpu_custom_call.1} parent=1 // pred_check_branch
      %37 = sbr.rel (0) target = $region13
    $region12: #{tpu_custom_call.1} parent=1 // pred_region
      %39 = dma.done [#allocation3], 512
    $region13: #{tpu_custom_call.1} parent=1 // pred_fallthru
      _
    // Predicated region
    $region14: #{tpu_custom_call.1} parent=1 // pred_check
      _
    $region15: #{tpu_custom_call.1} parent=1 // pred_check_branch
      %41 = sbr.rel (0) target = $region17
    $region16: #{tpu_custom_call.1} parent=1 // pred_region
      %43 = dma.done [#allocation6], 512
    $region17: #{tpu_custom_call.1} parent=1 // pred_fallthru
      _
    %v44 = vld [vmem:[#allocation2] sm:$0xff]
    %v45 = vld [vmem:[#allocation2 + $0x8] sm:$0xff]
    %s46 = scalar_lea.vmem [#allocation2], 16
    %v47 = vld [vmem:[%s46] sm:$0xff]
    %v48 = vld [vmem:[%s46 + $0x8] sm:$0xff]
    %51 = vrot.lane.b32.xlu0 %v47, 64
    %v52 = vpop.permute.xlu0 %51
    %53 = vrot.lane.b32.xlu0 %v48, 64
    %v54 = vpop.permute.xlu0 %53
    %vm57 = vcmask 523264
    %v58 = vsel %vm57, %v44, %v52
    %v59 = vsel %vm57, %v45, %v54
    %v60 = vlaneseq
    %v61 = vand.u32 %v60, 127
    %v62 = vand.u32 %v61, 63
    %vm63 = vcmp.lt.s32.totalorder %v62, 2
    %vm64 = vcmp.ge.s32.totalorder %v62, 62
    %v65 = vshra.s32 %v61, 6
    %v66 = vlaneseq
    %v67 = vshrl.u32 %v66, 7
    %v68 = vadd.s32 %v67, 8
    %v69 = vadd.s32 %v67, 16
    %v70 = vadd.s32 %v67, 24
    %v71 = vadd.s32 %v67, 32
    %v72 = vadd.s32 %v67, 40
    %v73 = vadd.s32 %v67, 48
    %v74 = vadd.s32 %v67, 56
    %v75 = vadd.s32 %v67, 64
    %v76 = vadd.s32 %v67, 72
    %v77 = vadd.s32 %v67, 80
    %v78 = vadd.s32 %v67, 88
    %v79 = vadd.s32 %v67, 96
    %v80 = vadd.s32 %v67, 104
    %v81 = vadd.s32 %v67, 112
    %v82 = vadd.s32 %v67, 120
    %v83 = vshra.s32 %v67, 6
    %v84 = vshra.s32 %v68, 6
    %v85 = vshra.s32 %v69, 6
    %v86 = vshra.s32 %v70, 6
    %v87 = vshra.s32 %v71, 6
    %v88 = vshra.s32 %v72, 6
    %v89 = vshra.s32 %v73, 6
    %v90 = vshra.s32 %v74, 6
    %v91 = vshra.s32 %v75, 6
    %v92 = vshra.s32 %v76, 6
    %v93 = vshra.s32 %v77, 6
    %v94 = vshra.s32 %v78, 6
    %v95 = vshra.s32 %v79, 6
    %v96 = vshra.s32 %v80, 6
    %v97 = vshra.s32 %v81, 6
    %v98 = vshra.s32 %v82, 6
    %vm99 = vcmp.eq.s32.totalorder %v83, %v61
    %vm100 = vcmp.eq.s32.totalorder %v84, %v61
    %vm101 = vcmp.eq.s32.totalorder %v85, %v61
    %vm102 = vcmp.eq.s32.totalorder %v86, %v61
    %vm103 = vcmp.eq.s32.totalorder %v87, %v61
    %vm104 = vcmp.eq.s32.totalorder %v88, %v61
    %vm105 = vcmp.eq.s32.totalorder %v89, %v61
    %vm106 = vcmp.eq.s32.totalorder %v90, %v61
    %vm107 = vcmp.eq.s32.totalorder %v91, %v61
    %vm108 = vcmp.eq.s32.totalorder %v92, %v61
    %vm109 = vcmp.eq.s32.totalorder %v93, %v61
    %vm110 = vcmp.eq.s32.totalorder %v94, %v61
    %vm111 = vcmp.eq.s32.totalorder %v95, %v61
    %vm112 = vcmp.eq.s32.totalorder %v96, %v61
    %vm113 = vcmp.eq.s32.totalorder %v97, %v61
    %vm114 = vcmp.eq.s32.totalorder %v98, %v61
    %v115 = vsel %vm99, 1, 0
    %v116 = vsel %vm100, 1, 0
    %v117 = vsel %vm101, 1, 0
    %v118 = vsel %vm102, 1, 0
    %v119 = vsel %vm103, 1, 0
    %v120 = vsel %vm104, 1, 0
    %v121 = vsel %vm105, 1, 0
    %v122 = vsel %vm106, 1, 0
    %v123 = vsel %vm107, 1, 0
    %v124 = vsel %vm108, 1, 0
    %v125 = vsel %vm109, 1, 0
    %v126 = vsel %vm110, 1, 0
    %v127 = vsel %vm111, 1, 0
    %v128 = vsel %vm112, 1, 0
    %v129 = vsel %vm113, 1, 0
    %v130 = vsel %vm114, 1, 0
    %v131 = vcvt.s32.f32 %v115
    %v132 = vcvt.s32.f32 %v116
    %v133 = vcvt.s32.f32 %v117
    %v134 = vcvt.s32.f32 %v118
    %v135 = vcvt.s32.f32 %v119
    %v136 = vcvt.s32.f32 %v120
    %v137 = vcvt.s32.f32 %v121
    %v138 = vcvt.s32.f32 %v122
    %v139 = vcvt.s32.f32 %v123
    %v140 = vcvt.s32.f32 %v124
    %v141 = vcvt.s32.f32 %v125
    %v142 = vcvt.s32.f32 %v126
    %v143 = vcvt.s32.f32 %v127
    %v144 = vcvt.s32.f32 %v128
    %v145 = vcvt.s32.f32 %v129
    %v146 = vcvt.s32.f32 %v130
    %v147 = vmul.f32 %v131, 0.015625
    %v148 = vmul.f32 %v132, 0.015625
    %v149 = vmul.f32 %v133, 0.015625
    %v150 = vmul.f32 %v134, 0.015625
    %v151 = vmul.f32 %v135, 0.015625
    %v152 = vmul.f32 %v136, 0.015625
    %v153 = vmul.f32 %v137, 0.015625
    %v154 = vmul.f32 %v138, 0.015625
    %v155 = vmul.f32 %v139, 0.015625
    %v156 = vmul.f32 %v140, 0.015625
    %v157 = vmul.f32 %v141, 0.015625
    %v158 = vmul.f32 %v142, 0.015625
    %v159 = vmul.f32 %v143, 0.015625
    %v160 = vmul.f32 %v144, 0.015625
    %v161 = vmul.f32 %v145, 0.015625
    %v162 = vmul.f32 %v146, 0.015625
    %v163 = vld [vmem:[#allocation5] sm:$0xff]
    %v164 = vld [vmem:[#allocation5 + $0x10] sm:$0xff]
    %v165 = vld [vmem:[#allocation5 + $0x8] sm:$0xff]
    %v166 = vld [vmem:[#allocation5 + $0x18] sm:$0xff]
    %167 = vrot.lane.b32.xlu0 %v58, 2
    %v168 = vpop.permute.xlu0 %167
    %169 = vrot.lane.b32.xlu0 %v59, 2
    %v170 = vpop.permute.xlu0 %169
    %v171 = vsel %vm63, 0.0, %v168
    %v172 = vsel %vm63, 0.0, %v170
    %173 = vrot.lane.b32.xlu0 %v58, 126
    %v174 = vpop.permute.xlu0 %173
    %175 = vrot.lane.b32.xlu0 %v59, 126
    %v176 = vpop.permute.xlu0 %175
    %v177 = vsel %vm64, 0.0, %v174
    %v178 = vsel %vm64, 0.0, %v176
    %vm179 = vcmask 392192
    %v181 = vsel %vm179, %v163, 0
    %v184 = vsel %vm179, %v164, 0
    %186 = vmatpush.msra.mxu0 0.0
    %187 = vmatpush.msra.mxu0 0.0
    %188 = vmatpush.msra.mxu0 0.0
    %189 = vmatpush.msra.mxu0 0.0
    %190 = vmatpush.msra.mxu0 0.0
    %191 = vmatpush.msra.mxu0 0.0
    %192 = vmatpush.msra.mxu0 0.0
    %193 = vmatpush.msra.mxu0 0.0
    %194 = vmatpush.msra.mxu0 0.0
    %195 = vmatpush.msra.mxu0 0.0
    %196 = vmatpush.msra.mxu0 %v178
    %197 = vmatpush.msra.mxu0 %v177
    %198 = vmatpush.msra.mxu0 %v59
    %199 = vmatpush.msra.mxu0 %v58
    %200 = vmatpush.msra.mxu0 %v172
    %201 = vmatpush.msra.mxu0 %v171
    %202 = vmatmul.f32.gmra.mxu0 %v181
    %v203 = vpop.f32.mrf.mxu0
    %v204 = vadd.f32 0.0, %v203
    %205 = vmatmul.f32.gmra.mxu0 %v184
    %v206 = vpop.f32.mrf.mxu0
    %v207 = vadd.f32 0.0, %v206
    %208 = vdwg.mxu0
    %209 = vmatpush.msra.mxu0 0.0078125
    %210 = vmatpush.msra.mxu0 0.0078125
    %211 = vmatpush.msra.mxu0 0.0078125
    %212 = vmatpush.msra.mxu0 0.0078125
    %213 = vmatpush.msra.mxu0 0.0078125
    %214 = vmatpush.msra.mxu0 0.0078125
    %215 = vmatpush.msra.mxu0 0.0078125
    %216 = vmatpush.msra.mxu0 0.0078125
    %217 = vmatpush.msra.mxu0 0.0078125
    %218 = vmatpush.msra.mxu0 0.0078125
    %219 = vmatpush.msra.mxu0 0.0078125
    %220 = vmatpush.msra.mxu0 0.0078125
    %221 = vmatpush.msra.mxu0 0.0078125
    %222 = vmatpush.msra.mxu0 0.0078125
    %223 = vmatpush.msra.mxu0 0.0078125
    %224 = vmatpush.msra.mxu0 0.0078125
    %225 = vmatmul.f32.gmra.mxu0 %v204
    %v226 = vpop.f32.mrf.mxu0
    %v227 = vadd.f32 0.0, %v226
    %228 = vmatmul.f32.gmra.mxu0 %v207
    %v229 = vpop.f32.mrf.mxu0
    %v230 = vadd.f32 0.0, %v229
    %231 = vdwg.mxu0
    %v232 = vmul.f32 %v204, %v204
    %v233 = vmul.f32 %v207, %v207
    %234 = vmatpush.msra.mxu0 0.0078125
    %235 = vmatpush.msra.mxu0 0.0078125
    %236 = vmatpush.msra.mxu0 0.0078125
    %237 = vmatpush.msra.mxu0 0.0078125
    %238 = vmatpush.msra.mxu0 0.0078125
    %239 = vmatpush.msra.mxu0 0.0078125
    %240 = vmatpush.msra.mxu0 0.0078125
    %241 = vmatpush.msra.mxu0 0.0078125
    %242 = vmatpush.msra.mxu0 0.0078125
    %243 = vmatpush.msra.mxu0 0.0078125
    %244 = vmatpush.msra.mxu0 0.0078125
    %245 = vmatpush.msra.mxu0 0.0078125
    %246 = vmatpush.msra.mxu0 0.0078125
    %247 = vmatpush.msra.mxu0 0.0078125
    %248 = vmatpush.msra.mxu0 0.0078125
    %249 = vmatpush.msra.mxu0 0.0078125
    %250 = vmatmul.f32.gmra.mxu0 %v232
    %v251 = vpop.f32.mrf.mxu0
    %v252 = vadd.f32 0.0, %v251
    %253 = vmatmul.f32.gmra.mxu0 %v233
    %v254 = vpop.f32.mrf.mxu0
    %v255 = vadd.f32 0.0, %v254
    %256 = vdwg.mxu0
    %v257 = vmul.f32 %v227, %v227
    %v258 = vmul.f32 %v230, %v230
    %v259 = vsub.f32 %v252, %v257
    %v260 = vsub.f32 %v255, %v258
    %v261 = vadd.f32 %v259, 1e-05
    %v262 = vadd.f32 %v260, 1e-05
    %v263 = vrsqrt.pop %v261
    %v264 = vmul.f32 %v263, %v261
    %v265 = vmul.f32 %v264, %v263
    %v266 = vmul.f32 0.5, %v265
    %v267 = vsub.f32 1.5, %v266
    %v268 = vmul.f32 %v263, %v267
    %vm269 = vweird.f32 %v261
    %vm270 = vweird.f32 %v263
    %vm271 = vmor %vm269, %vm270
    %v272 = vsel %vm271, %v263, %v268
    %v273 = vrsqrt.pop %v262
    %v274 = vmul.f32 %v273, %v262
    %v275 = vmul.f32 %v274, %v273
    %v276 = vmul.f32 0.5, %v275
    %v277 = vsub.f32 1.5, %v276
    %v278 = vmul.f32 %v273, %v277
    %vm279 = vweird.f32 %v262
    %vm280 = vweird.f32 %v273
    %vm281 = vmor %vm279, %vm280
    %v282 = vsel %vm281, %v273, %v278
    %v283 = vmul.f32 %v165, %v272
    %v284 = vmul.f32 %v166, %v282
    %v285 = vmul.f32 %v227, %v283
    %v286 = vmul.f32 %v230, %v284
    %289 = vrot.lane.b32.xlu0 %v285, 1
    %v290 = vpop.permute.xlu0 %289
    %291 = vrot.lane.b32.xlu0 %v286, 1
    %v292 = vpop.permute.xlu0 %291
    %v295 = vsub.f32 %v165, %v290
    %v296 = vsub.f32 %v166, %v292
    %298 = vset.pattern.permute.xlu0 0
    %299 = vperm.xlu0 %298, %v283
    %v300 = vpop.permute.xlu0 %299
    %303 = vset.pattern.permute.xlu0 0
    %304 = vperm.xlu0 %303, %v284
    %v305 = vpop.permute.xlu0 %304
    %v307 = vmul.f32 %v204, %v300
    %v308 = vmul.f32 %v207, %v305
    %310 = vset.pattern.permute.xlu0 1
    %311 = vperm.xlu0 %310, %v295
    %v312 = vpop.permute.xlu0 %311
    %315 = vset.pattern.permute.xlu0 1
    %316 = vperm.xlu0 %315, %v296
    %v317 = vpop.permute.xlu0 %316
    %v319 = vadd.f32 %v307, %v312
    %v320 = vadd.f32 %v308, %v317
    %v321 = vmax.f32 %v319, 0.0
    %v322 = vmax.f32 %v320, 0.0
    %323 = vrot.lane.b32.xlu0 %v321, 2
    %v324 = vpop.permute.xlu0 %323
    %325 = vrot.lane.b32.xlu0 %v322, 2
    %v326 = vpop.permute.xlu0 %325
    %v327 = vsel %vm63, 0.0, %v324
    %v328 = vsel %vm63, 0.0, %v326
    %329 = vrot.lane.b32.xlu0 %v321, 126
    %v330 = vpop.permute.xlu0 %329
    %331 = vrot.lane.b32.xlu0 %v322, 126
    %v332 = vpop.permute.xlu0 %331
    %v333 = vsel %vm64, 0.0, %v330
    %v334 = vsel %vm64, 0.0, %v332
    %335 = vrot.lane.b32.xlu0 %v163, 80
    %v336 = vpop.permute.xlu0 %335
    %337 = vrot.lane.b32.xlu0 %v164, 80
    %v338 = vpop.permute.xlu0 %337
    %v339 = vsel %vm179, %v336, 0
    %v341 = vsel %vm179, %v338, 0
    %343 = vmatpush.msra.mxu0 0.0
    %344 = vmatpush.msra.mxu0 0.0
    %345 = vmatpush.msra.mxu0 0.0
    %346 = vmatpush.msra.mxu0 0.0
    %347 = vmatpush.msra.mxu0 0.0
    %348 = vmatpush.msra.mxu0 0.0
    %349 = vmatpush.msra.mxu0 0.0
    %350 = vmatpush.msra.mxu0 0.0
    %351 = vmatpush.msra.mxu0 0.0
    %352 = vmatpush.msra.mxu0 0.0
    %353 = vmatpush.msra.mxu0 %v334
    %354 = vmatpush.msra.mxu0 %v333
    %355 = vmatpush.msra.mxu0 %v322
    %356 = vmatpush.msra.mxu0 %v321
    %357 = vmatpush.msra.mxu0 %v328
    %358 = vmatpush.msra.mxu0 %v327
    %359 = vmatmul.f32.gmra.mxu0 %v339
    %v360 = vpop.f32.mrf.mxu0
    %v361 = vadd.f32 0.0, %v360
    %362 = vmatmul.f32.gmra.mxu0 %v341
    %v363 = vpop.f32.mrf.mxu0
    %v364 = vadd.f32 0.0, %v363
    %365 = vdwg.mxu0
    %366 = vmatpush.msra.mxu0 0.0078125
    %367 = vmatpush.msra.mxu0 0.0078125
    %368 = vmatpush.msra.mxu0 0.0078125
    %369 = vmatpush.msra.mxu0 0.0078125
    %370 = vmatpush.msra.mxu0 0.0078125
    %371 = vmatpush.msra.mxu0 0.0078125
    %372 = vmatpush.msra.mxu0 0.0078125
    %373 = vmatpush.msra.mxu0 0.0078125
    %374 = vmatpush.msra.mxu0 0.0078125
    %375 = vmatpush.msra.mxu0 0.0078125
    %376 = vmatpush.msra.mxu0 0.0078125
    %377 = vmatpush.msra.mxu0 0.0078125
    %378 = vmatpush.msra.mxu0 0.0078125
    %379 = vmatpush.msra.mxu0 0.0078125
    %380 = vmatpush.msra.mxu0 0.0078125
    %381 = vmatpush.msra.mxu0 0.0078125
    %382 = vmatmul.f32.gmra.mxu0 %v361
    %v383 = vpop.f32.mrf.mxu0
    %v384 = vadd.f32 0.0, %v383
    %385 = vmatmul.f32.gmra.mxu0 %v364
    %v386 = vpop.f32.mrf.mxu0
    %v387 = vadd.f32 0.0, %v386
    %388 = vdwg.mxu0
    %v389 = vmul.f32 %v361, %v361
    %v390 = vmul.f32 %v364, %v364
    %391 = vmatpush.msra.mxu0 0.0078125
    %392 = vmatpush.msra.mxu0 0.0078125
    %393 = vmatpush.msra.mxu0 0.0078125
    %394 = vmatpush.msra.mxu0 0.0078125
    %395 = vmatpush.msra.mxu0 0.0078125
    %396 = vmatpush.msra.mxu0 0.0078125
    %397 = vmatpush.msra.mxu0 0.0078125
    %398 = vmatpush.msra.mxu0 0.0078125
    %399 = vmatpush.msra.mxu0 0.0078125
    %400 = vmatpush.msra.mxu0 0.0078125
    %401 = vmatpush.msra.mxu0 0.0078125
    %402 = vmatpush.msra.mxu0 0.0078125
    %403 = vmatpush.msra.mxu0 0.0078125
    %404 = vmatpush.msra.mxu0 0.0078125
    %405 = vmatpush.msra.mxu0 0.0078125
    %406 = vmatpush.msra.mxu0 0.0078125
    %407 = vmatmul.f32.gmra.mxu0 %v389
    %v408 = vpop.f32.mrf.mxu0
    %v409 = vadd.f32 0.0, %v408
    %410 = vmatmul.f32.gmra.mxu0 %v390
    %v411 = vpop.f32.mrf.mxu0
    %v412 = vadd.f32 0.0, %v411
    %413 = vdwg.mxu0
    %v414 = vmul.f32 %v384, %v384
    %v415 = vmul.f32 %v387, %v387
    %v416 = vsub.f32 %v409, %v414
    %v417 = vsub.f32 %v412, %v415
    %v418 = vadd.f32 %v416, 1e-05
    %v419 = vadd.f32 %v417, 1e-05
    %v420 = vrsqrt.pop %v418
    %v421 = vmul.f32 %v420, %v418
    %v422 = vmul.f32 %v421, %v420
    %v423 = vmul.f32 0.5, %v422
    %v424 = vsub.f32 1.5, %v423
    %v425 = vmul.f32 %v420, %v424
    %vm426 = vweird.f32 %v418
    %vm427 = vweird.f32 %v420
    %vm428 = vmor %vm426, %vm427
    %v429 = vsel %vm428, %v420, %v425
    %v430 = vrsqrt.pop %v419
    %v431 = vmul.f32 %v430, %v419
    %v432 = vmul.f32 %v431, %v430
    %v433 = vmul.f32 0.5, %v432
    %v434 = vsub.f32 1.5, %v433
    %v435 = vmul.f32 %v430, %v434
    %vm436 = vweird.f32 %v419
    %vm437 = vweird.f32 %v430
    %vm438 = vmor %vm436, %vm437
    %v439 = vsel %vm438, %v430, %v435
    %442 = vrot.lane.b32.xlu0 %v429, 2
    %v443 = vpop.permute.xlu0 %442
    %444 = vrot.lane.b32.xlu0 %v439, 2
    %v445 = vpop.permute.xlu0 %444
    %v448 = vmul.f32 %v165, %v443
    %v449 = vmul.f32 %v166, %v445
    %452 = vrot.lane.b32.xlu0 %v448, 126
    %v453 = vpop.permute.xlu0 %452
    %454 = vrot.lane.b32.xlu0 %v449, 126
    %v455 = vpop.permute.xlu0 %454
    %v458 = vmul.f32 %v384, %v453
    %v459 = vmul.f32 %v387, %v455
    %462 = vrot.lane.b32.xlu0 %v458, 3
    %v463 = vpop.permute.xlu0 %462
    %464 = vrot.lane.b32.xlu0 %v459, 3
    %v465 = vpop.permute.xlu0 %464
    %v468 = vsub.f32 %v165, %v463
    %v469 = vsub.f32 %v166, %v465
    %470 = vset.pattern.permute.xlu0 2
    %471 = vperm.xlu0 %470, %v448
    %v472 = vpop.permute.xlu0 %471
    %474 = vset.pattern.permute.xlu0 2
    %475 = vperm.xlu0 %474, %v449
    %v476 = vpop.permute.xlu0 %475
    %v478 = vmul.f32 %v361, %v472
    %v479 = vmul.f32 %v364, %v476
    %481 = vset.pattern.permute.xlu0 3
    %482 = vperm.xlu0 %481, %v468
    %v483 = vpop.permute.xlu0 %482
    %486 = vset.pattern.permute.xlu0 3
    %487 = vperm.xlu0 %486, %v469
    %v488 = vpop.permute.xlu0 %487
    %v490 = vadd.f32 %v478, %v483
    %v491 = vadd.f32 %v479, %v488
    %v492 = vmax.f32 %v490, 0.0
    %v493 = vmax.f32 %v491, 0.0
    %494 = vmatpush.msra.mxu0 %v162
    %495 = vmatpush.msra.mxu0 %v161
    %496 = vmatpush.msra.mxu0 %v160
    %497 = vmatpush.msra.mxu0 %v159
    %498 = vmatpush.msra.mxu0 %v158
    %499 = vmatpush.msra.mxu0 %v157
    %500 = vmatpush.msra.mxu0 %v156
    %501 = vmatpush.msra.mxu0 %v155
    %502 = vmatpush.msra.mxu0 %v154
    %503 = vmatpush.msra.mxu0 %v153
    %504 = vmatpush.msra.mxu0 %v152
    %505 = vmatpush.msra.mxu0 %v151
    %506 = vmatpush.msra.mxu0 %v150
    %507 = vmatpush.msra.mxu0 %v149
    %508 = vmatpush.msra.mxu0 %v148
    %509 = vmatpush.msra.mxu0 %v147
    %510 = vmatmul.f32.gmra.mxu0 %v492
    %v511 = vpop.f32.mrf.mxu0
    %v512 = vadd.f32 0.0, %v511
    %513 = vmatmul.f32.gmra.mxu0 %v493
    %v514 = vpop.f32.mrf.mxu0
    %v515 = vadd.f32 0.0, %v514
    %516 = vdwg.mxu0
    %518 = vset.pattern.permute.xlu0 4
    %519 = vperm.xlu0 %518, %v165
    %v520 = vpop.permute.xlu0 %519
    %523 = vset.pattern.permute.xlu0 4
    %524 = vperm.xlu0 %523, %v166
    %v525 = vpop.permute.xlu0 %524
    %527 = vrot.lane.b32.xlu0 %v163, 32
    %v528 = vpop.permute.xlu0 %527
    %529 = vrot.lane.b32.xlu0 %v164, 32
    %v530 = vpop.permute.xlu0 %529
    %vm531 = vcmask 130048
    %v532 = vsel %vm531, %v528, 0
    %v534 = vsel %vm531, %v530, 0
    %536 = vmatpush.msra.mxu0 0.0
    %537 = vmatpush.msra.mxu0 0.0
    %538 = vmatpush.msra.mxu0 0.0
    %539 = vmatpush.msra.mxu0 0.0
    %540 = vmatpush.msra.mxu0 0.0
    %541 = vmatpush.msra.mxu0 0.0
    %542 = vmatpush.msra.mxu0 0.0
    %543 = vmatpush.msra.mxu0 0.0
    %544 = vmatpush.msra.mxu0 0.0
    %545 = vmatpush.msra.mxu0 0.0
    %546 = vmatpush.msra.mxu0 0.0
    %547 = vmatpush.msra.mxu0 0.0
    %548 = vmatpush.msra.mxu0 0.0
    %549 = vmatpush.msra.mxu0 0.0
    %550 = vmatpush.msra.mxu0 %v515
    %551 = vmatpush.msra.mxu0 %v512
    %552 = vmatmul.f32.gmra.mxu0 %v532
    %v553 = vpop.f32.mrf.mxu0
    %v554 = vadd.f32 %v520, %v553
    %555 = vmatmul.f32.gmra.mxu0 %v534
    %v556 = vpop.f32.mrf.mxu0
    %v557 = vadd.f32 %v525, %v556
    %558 = vdwg.mxu0
    %v559 = vmax.f32 %v554, 0.0
    %v560 = vmax.f32 %v557, 0.0
    %561 = vset.pattern.permute.xlu0 5
    %562 = vperm.xlu0 %561, %v165
    %v563 = vpop.permute.xlu0 %562
    %565 = vset.pattern.permute.xlu0 5
    %566 = vperm.xlu0 %565, %v166
    %v567 = vpop.permute.xlu0 %566
    %569 = vrot.lane.b32.xlu0 %v163, 16
    %v570 = vpop.permute.xlu0 %569
    %571 = vrot.lane.b32.xlu0 %v164, 16
    %v572 = vpop.permute.xlu0 %571
    %v573 = vsel %vm531, %v570, 0
    %v575 = vsel %vm531, %v572, 0
    %577 = vmatpush.msra.mxu0 0.0
    %578 = vmatpush.msra.mxu0 0.0
    %579 = vmatpush.msra.mxu0 0.0
    %580 = vmatpush.msra.mxu0 0.0
    %581 = vmatpush.msra.mxu0 0.0
    %582 = vmatpush.msra.mxu0 0.0
    %583 = vmatpush.msra.mxu0 0.0
    %584 = vmatpush.msra.mxu0 0.0
    %585 = vmatpush.msra.mxu0 0.0
    %586 = vmatpush.msra.mxu0 0.0
    %587 = vmatpush.msra.mxu0 0.0
    %588 = vmatpush.msra.mxu0 0.0
    %589 = vmatpush.msra.mxu0 0.0
    %590 = vmatpush.msra.mxu0 0.0
    %591 = vmatpush.msra.mxu0 %v560
    %592 = vmatpush.msra.mxu0 %v559
    %593 = vmatmul.f32.gmra.mxu0 %v573
    %v594 = vpop.f32.mrf.mxu0
    %v595 = vadd.f32 %v563, %v594
    %596 = vmatmul.f32.gmra.mxu0 %v575
    %v597 = vpop.f32.mrf.mxu0
    %v598 = vadd.f32 %v567, %v597
    %599 = vdwg.mxu0
    %v600 = vxor.u32 %v595, 2147483648
    %v601 = vxor.u32 %v598, 2147483648
    %v602 = vmul.f32 %v600, 1.442695
    %v603 = vpow.pop %v602
    %v604 = vmul.f32 %v601, 1.442695
    %v605 = vpow.pop %v604
    %v606 = vadd.f32 %v603, 1.0
    %v607 = vadd.f32 %v605, 1.0
    %v608 = vrcp.pop %v606
    %v609 = vmul.f32 %v606, %v608
    %v610 = vsub.f32 1.0, %v609
    %v611 = vmul.f32 %v608, %v610
    %v612 = vadd.f32 %v608, %v611
    %vm613 = vweird.f32 %v606
    %vm614 = vweird.f32 %v608
    %vm615 = vmor %vm613, %vm614
    %v616 = vsel %vm615, %v608, %v612
    %v617 = vand.u32 2147483647, %v606
    %vm618 = vcmp.eq.f32.partialorder %v617, 8.507059e+37
    %v619 = vand.u32 %v606, 2147483648
    %v620 = vor.u32 1.1754944e-38, %v619
    %v621 = vsel %vm618, %v620, %v616
    %v622 = vmul.f32 1.0, %v621
    %v623 = vrcp.pop %v607
    %v624 = vmul.f32 %v607, %v623
    %v625 = vsub.f32 1.0, %v624
    %v626 = vmul.f32 %v623, %v625
    %v627 = vadd.f32 %v623, %v626
    %vm628 = vweird.f32 %v607
    %vm629 = vweird.f32 %v623
    %vm630 = vmor %vm628, %vm629
    %v631 = vsel %vm630, %v623, %v627
    %v632 = vand.u32 2147483647, %v607
    %vm633 = vcmp.eq.f32.partialorder %v632, 8.507059e+37
    %v634 = vand.u32 %v607, 2147483648
    %v635 = vor.u32 1.1754944e-38, %v634
    %v636 = vsel %vm633, %v635, %v631
    %v637 = vmul.f32 1.0, %v636
    %vm638 = vcmp.eq.s32.totalorder %v65, 1
    %640 = vset.pattern.permute.xlu0 1
    %641 = vperm.xlu0 %640, %v622
    %v642 = vpop.permute.xlu0 %641
    %645 = vset.pattern.permute.xlu0 1
    %646 = vperm.xlu0 %645, %v637
    %v647 = vpop.permute.xlu0 %646
    %649 = vset.pattern.permute.xlu0 0
    %650 = vperm.xlu0 %649, %v622
    %v651 = vpop.permute.xlu0 %650
    %653 = vset.pattern.permute.xlu0 0
    %654 = vperm.xlu0 %653, %v637
    %v655 = vpop.permute.xlu0 %654
    %v657 = vsel %vm638, %v642, %v651
    %v658 = vsel %vm638, %v647, %v655
    %v659 = vadd.f32 %v58, %v492
    %v660 = vadd.f32 %v59, %v493
    %v661 = vadd.f32 %v659, %v657
    %v662 = vadd.f32 %v660, %v658
    %663 = vst.msk [vmem:[#allocation7] sm:$0xff] %vm57, %v661
    %664 = vst.msk [vmem:[#allocation7 + $0x8] sm:$0xff] %vm57, %v662
    %667 = vrot.lane.b32.xlu0 %v661, 64
    %v668 = vpop.permute.xlu0 %667
    %669 = vrot.lane.b32.xlu0 %v662, 64
    %v670 = vpop.permute.xlu0 %669
    %s673 = scalar_lea.vmem [#allocation7], 16
    %674 = vst.msk [vmem:[%s673] sm:$0xff] %vm57, %v668
    %675 = vst.msk [vmem:[%s673 + $0x8] sm:$0xff] %vm57, %v670
    // Predicated region
    $region18: #{tpu_custom_call.1} parent=1 // pred_check
      _
    $region19: #{tpu_custom_call.1} parent=1 // pred_check_branch
      %677 = sbr.rel (0) target = $region21
    $region20: #{tpu_custom_call.1} parent=1 // pred_region
      %679 = vsyncadd [#allocation4], 0
      %s680 = sshll.u32 [#allocation7], 4
      %s681 = int_to_ptr.vmem [resolvable:$true] %s680
      %s682 = sshll.u32 %s2, 4
      %s683 = int_to_ptr.hbm [resolvable:$true] %s682
      %688 = dma.vmem_to_hbm [thread:$0]  %s681, 512, %s683, [#allocation4], 128, 128, 8
    $region21: #{tpu_custom_call.1} parent=1 // pred_fallthru
      _
    // Predicated region
    $region22: #{tpu_custom_call.1} parent=1 // pred_check
      _
    $region23: #{tpu_custom_call.1} parent=1 // pred_check_branch
      %690 = sbr.rel (0) target = $region25
    $region24: #{tpu_custom_call.1} parent=1 // pred_region
      %692 = dma.done [#allocation4], 512
    $region25: #{tpu_custom_call.1} parent=1 // pred_fallthru
      _
    %693 = vsyncpa [#allocation3], 1
    %694 = vsyncpa [#allocation6], 1
    %695 = vsyncpa [#allocation4], 1

</llo_original>
